<compile_context>
chip_gen: v7x
topology: tpu7x:2x2x1
jax: 0.10.0
libtpu: 0.0.40
codegen_flags: <defaults>
</compile_context>

<pallas_src>
import functools
import math

import jax
import jax.numpy as jnp
from jax.experimental import pallas as pl
from jax.experimental.pallas import tpu as pltpu

_LN_EPS = 1e-12


# ---------------------------------------------------------------------------
# Tile-size selection (respects the (8, 128) BlockSpec constraint)
# ---------------------------------------------------------------------------

def _pick_tile(dim, target, align):
    """Largest tile <= target that divides `dim` and is a multiple of `align`
    (falls back to the full extent, which is always legal)."""
    if dim <= target:
        return dim
    if dim % target == 0:
        return target
    t = (target // align) * align
    while t >= align:
        if dim % t == 0:
            return t
        t -= align
    return dim


# ---------------------------------------------------------------------------
# Pallas kernels
# ---------------------------------------------------------------------------

def _linear_kernel(x_ref, w_ref, b_ref, o_ref, acc_ref):
    # o = x @ w + b ; grid = (M-tiles, N-tiles, K-tiles), K is the reduction.
    k = pl.program_id(2)

    @pl.when(k == 0)
    def _():
        acc_ref[...] = jnp.zeros_like(acc_ref)

    acc_ref[...] += jnp.dot(x_ref[...], w_ref[...],
                            preferred_element_type=jnp.float32)

    @pl.when(k == pl.num_programs(2) - 1)
    def _():
        o_ref[...] = (acc_ref[...] + b_ref[...]).astype(o_ref.dtype)


def _linear_gelu_kernel(x_ref, w_ref, b_ref, o_ref, acc_ref):
    # o = GELU(x @ w + b) with the activation fused into the last K step.
    k = pl.program_id(2)

    @pl.when(k == 0)
    def _():
        acc_ref[...] = jnp.zeros_like(acc_ref)

    acc_ref[...] += jnp.dot(x_ref[...], w_ref[...],
                            preferred_element_type=jnp.float32)

    @pl.when(k == pl.num_programs(2) - 1)
    def _():
        y = acc_ref[...] + b_ref[...]
        # TODO(synk): reference GELU is exact (erf); tanh approximation used
        # here for robust Mosaic lowering (EUP tanh, numerically ~1e-3 close).
        o_ref[...] = jax.nn.gelu(y, approximate=True).astype(o_ref.dtype)


def _linear_res_ln_kernel(x_ref, w_ref, b_ref, res_ref, g_ref, be_ref,
                          o_ref, acc_ref):
    # o = LayerNorm(x @ w + b + res) ; grid = (M-tiles, K-tiles), N kept whole
    # so the row mean/var can be computed in the fused epilogue.
    k = pl.program_id(1)

    @pl.when(k == 0)
    def _():
        acc_ref[...] = jnp.zeros_like(acc_ref)

    acc_ref[...] += jnp.dot(x_ref[...], w_ref[...],
                            preferred_element_type=jnp.float32)

    @pl.when(k == pl.num_programs(1) - 1)
    def _():
        y = acc_ref[...] + b_ref[...] + res_ref[...].astype(jnp.float32)
        mu = jnp.mean(y, axis=-1, keepdims=True)
        var = jnp.mean(jnp.square(y - mu), axis=-1, keepdims=True)
        yn = (y - mu) * jax.lax.rsqrt(var + _LN_EPS)
        o_ref[...] = (yn * g_ref[...] + be_ref[...]).astype(o_ref.dtype)


def _attention_kernel(qkv_ref, m_ref, o_ref, *, scale, head_dim, hidden):
    # Grid = (batch, head).  qkv_ref is this batch's (S, 3H) bf16 slab
    # (VMEM-resident across heads), o_ref is this batch's (S, H) output slab
    # (also resident across heads; written back lane-dense once per batch).
    h = pl.program_id(1)
    off_q = pl.multiple_of(h * head_dim, head_dim)
    off_k = pl.multiple_of(hidden + h * head_dim, head_dim)
    off_v = pl.multiple_of(2 * hidden + h * head_dim, head_dim)

    q = qkv_ref[:, pl.ds(off_q, head_dim)]                 # (S, hd) bf16
    k = qkv_ref[:, pl.ds(off_k, head_dim)]
    v = qkv_ref[:, pl.ds(off_v, head_dim)]

    s = jax.lax.dot_general(q, k, (((1,), (1,)), ((), ())),
                            preferred_element_type=jnp.float32) * scale
    s = s + m_ref[...]                                      # additive key mask
    s = s - jnp.max(s, axis=-1, keepdims=True)
    p = jnp.exp(s)
    p = p * (1.0 / jnp.sum(p, axis=-1, keepdims=True))      # exact normalization
    ctx = jnp.dot(p.astype(v.dtype), v, preferred_element_type=jnp.float32)

    o_ref[:, pl.ds(off_q, head_dim)] = ctx.astype(o_ref.dtype)
    # TODO(synk): for long sequences (esp. v7x's 64 MiB VMEM, S >~ 1k) this
    # should become a flash-style blocked softmax over the key axis.


# ---------------------------------------------------------------------------
# pallas_call wrappers
# ---------------------------------------------------------------------------

def linear(x, w, b, *, activation=None, out_dtype=jnp.bfloat16,
           tm=512, tn=768, tk=1024):
    """y = act(x @ w + b), tiled/pipelined, bf16 MXU operands, f32 accumulate.
    x and w are expected to already be bf16 (no per-call casts)."""
    M, K = x.shape
    _, N = w.shape
    tm = _pick_tile(M, tm, 16)     # 16-row alignment for bf16 sublane packing
    tn = _pick_tile(N, tn, 128)
    tk = _pick_tile(K, tk, 128)
    kern = _linear_gelu_kernel if activation == "gelu" else _linear_kernel
    return pl.pallas_call(
        kern,
        out_shape=jax.ShapeDtypeStruct((M, N), out_dtype),
        grid=(M // tm, N // tn, K // tk),
        in_specs=[
            pl.BlockSpec((tm, tk), lambda i, j, k: (i, k)),
            pl.BlockSpec((tk, tn), lambda i, j, k: (k, j)),
            pl.BlockSpec((1, tn), lambda i, j, k: (0, j)),
        ],
        out_specs=pl.BlockSpec((tm, tn), lambda i, j, k: (i, j)),
        scratch_shapes=[pltpu.VMEM((tm, tn), jnp.float32)],
        compiler_params=pltpu.CompilerParams(
            dimension_semantics=("parallel", "parallel", "arbitrary")),
        cost_estimate=pl.CostEstimate(
            flops=2 * M * K * N,
            transcendentals=M * N if activation == "gelu" else 0,
            bytes_accessed=(x.dtype.itemsize * M * K + w.dtype.itemsize * K * N
                            + jnp.dtype(out_dtype).itemsize * M * N)),
    )(x, w, b)


def linear_res_ln(x, w, b, res, gamma, beta, *, out_dtype=jnp.bfloat16,
                  tm=512, tk=1024):
    """y = LayerNorm(x @ w + b + res) with the epilogue fused into the matmul."""
    M, K = x.shape
    _, N = w.shape
    tm = _pick_tile(M, tm, 16)
    tk = _pick_tile(K, tk, 128)
    return pl.pallas_call(
        _linear_res_ln_kernel,
        out_shape=jax.ShapeDtypeStruct((M, N), out_dtype),
        grid=(M // tm, K // tk),
        in_specs=[
            pl.BlockSpec((tm, tk), lambda i, k: (i, k)),
            pl.BlockSpec((tk, N), lambda i, k: (k, 0)),
            pl.BlockSpec((1, N), lambda i, k: (0, 0)),
            pl.BlockSpec((tm, N), lambda i, k: (i, 0)),
            pl.BlockSpec((1, N), lambda i, k: (0, 0)),
            pl.BlockSpec((1, N), lambda i, k: (0, 0)),
        ],
        out_specs=pl.BlockSpec((tm, N), lambda i, k: (i, 0)),
        scratch_shapes=[pltpu.VMEM((tm, N), jnp.float32)],
        compiler_params=pltpu.CompilerParams(
            dimension_semantics=("parallel", "arbitrary")),
        cost_estimate=pl.CostEstimate(
            flops=2 * M * K * N,
            transcendentals=M,
            bytes_accessed=(x.dtype.itemsize * M * K + w.dtype.itemsize * K * N
                            + res.dtype.itemsize * M * N
                            + jnp.dtype(out_dtype).itemsize * M * N)),
    )(x, w, b, res, gamma, beta)


def attention(qkv, mask2d, *, batch, seq, num_heads, hidden):
    """qkv: (B*S, 3H) bf16 fused projection; mask2d: additive (B, S) f32.
    Returns the attention context as a lane-dense (B*S, H) bf16 slab whose
    head layout matches PyTorch's permute(0,2,1,3).reshape(B, S, H)."""
    hd = hidden // num_heads
    M = batch * seq
    kern = functools.partial(_attention_kernel, scale=1.0 / math.sqrt(hd),
                             head_dim=hd, hidden=hidden)
    return pl.pallas_call(
        kern,
        out_shape=jax.ShapeDtypeStruct((M, hidden), jnp.bfloat16),
        grid=(batch, num_heads),
        in_specs=[
            # Per-batch (S, 3H) slab: block index constant over the head axis,
            # so it is DMA'd once per batch and stays resident across heads.
            pl.BlockSpec((seq, 3 * hidden), lambda b, h: (b, 0)),
            pl.BlockSpec((1, seq), lambda b, h: (b, 0)),
        ],
        # (S, H) output slab resident across heads; each head writes its own
        # lane slice, HBM writeback is one lane-dense block per batch.
        out_specs=pl.BlockSpec((seq, hidden), lambda b, h: (b, 0)),
        compiler_params=pltpu.CompilerParams(
            dimension_semantics=("parallel", "arbitrary")),
        cost_estimate=pl.CostEstimate(
            flops=4 * batch * num_heads * seq * seq * hd,
            transcendentals=batch * num_heads * seq * seq,
            bytes_accessed=(qkv.dtype.itemsize * M * 3 * hidden
                            + 4 * batch * seq + 2 * M * hidden)),
    )(qkv, mask2d)


# ---------------------------------------------------------------------------
# RobertaLayer / RobertaSelfEncoder forward
# ---------------------------------------------------------------------------

def roberta_layer_fwd(hidden, ext_mask, p, num_heads):
    B, S, H = hidden.shape
    # Single bf16 cast of the layer input; all intermediate activations stay
    # bf16 end-to-end (kernels emit bf16 directly, no separate convert ops).
    x2d = hidden.reshape(B * S, H).astype(jnp.bfloat16)

    # Fused Q/K/V projection (one matmul instead of three tiny ones).
    qkv = linear(x2d, p["w_qkv"], p["b_qkv"], out_dtype=jnp.bfloat16)  # (B*S,3H)

    # Attention reads heads straight out of the 2-D qkv slab and writes a
    # lane-dense (B*S, H) context -- no host-side transposes around it.
    mask2d = ext_mask.reshape(B, S).astype(jnp.float32)
    ctx2d = attention(qkv, mask2d, batch=B, seq=S, num_heads=num_heads,
                      hidden=H)

    # Self-output: dense + residual + LayerNorm, fused.
    # TODO(synk): nn.Dropout is treated as identity (inference mode).
    attn_out = linear_res_ln(ctx2d, p["w_o"], p["b_o"], x2d,
                             p["ln1_g"], p["ln1_b"], out_dtype=jnp.bfloat16)
    # Intermediate: dense + GELU, fused, bf16 out (halves the 4H tensor's HBM).
    inter = linear(attn_out, p["w_i"], p["b_i"], activation="gelu",
                   out_dtype=jnp.bfloat16)
    # Output: dense + residual + LayerNorm, fused; module output kept f32.
    out = linear_res_ln(inter, p["w_out"], p["b_out"], attn_out,
                        p["ln2_g"], p["ln2_b"], out_dtype=jnp.float32)
    return out.reshape(B, S, H)


def roberta_self_encoder_fwd(hidden_states, ext_mask, params, num_heads,
                             output_all_encoded_layers=True):
    all_encoder_layers = []
    for p in params["layers"]:
        hidden_states = roberta_layer_fwd(hidden_states, ext_mask, p, num_heads)
        if output_all_encoded_layers:
            all_encoder_layers.append(hidden_states)
    if not output_all_encoded_layers:
        all_encoder_layers.append(hidden_states)
    return all_encoder_layers


# ---------------------------------------------------------------------------
# Deterministic parameter init (weights pre-cast to bf16 once)
# ---------------------------------------------------------------------------

def init_params(key, hidden, intermediate, num_layers=1):
    def dense(k, din, dout):
        w = 0.02 * jax.random.normal(k, (din, dout), jnp.float32)
        return w, jnp.zeros((dout,), jnp.float32)

    layers = []
    for _ in range(num_layers):
        key, kq, kk, kv, ko, ki, kout = jax.random.split(key, 7)
        wq, bq = dense(kq, hidden, hidden)
        wk, bk = dense(kk, hidden, hidden)
        wv, bv = dense(kv, hidden, hidden)
        w_o, b_o = dense(ko, hidden, hidden)
        w_i, b_i = dense(ki, hidden, intermediate)
        w_out, b_out = dense(kout, intermediate, hidden)
        layers.append(dict(
            # Weights stored bf16 (MXU operands, half the HBM footprint, no
            # per-forward cast pass); biases / LN params stay f32 (1, N) rows
            # that are added to the f32 accumulator in the epilogues.
            w_qkv=jnp.concatenate([wq, wk, wv], axis=1).astype(jnp.bfloat16),
            b_qkv=jnp.concatenate([bq, bk, bv], axis=0).reshape(1, -1),
            w_o=w_o.astype(jnp.bfloat16), b_o=b_o.reshape(1, -1),
            w_i=w_i.astype(jnp.bfloat16), b_i=b_i.reshape(1, -1),
            w_out=w_out.astype(jnp.bfloat16), b_out=b_out.reshape(1, -1),
            ln1_g=jnp.ones((1, hidden), jnp.float32),
            ln1_b=jnp.zeros((1, hidden), jnp.float32),
            ln2_g=jnp.ones((1, hidden), jnp.float32),
            ln2_b=jnp.zeros((1, hidden), jnp.float32)))
    return {"layers": layers}


if __name__ == "__main__":
    key = jax.random.PRNGKey(0)
    B, S, H = 2, 8, 32          # batch, seq, hidden
    NUM_HEADS = 4               # head_dim = 8
    INTER = 64                  # intermediate size (4H)

    k1, k2 = jax.random.split(key)
    hidden = jax.random.normal(k1, (B, S, H), jnp.float32)

    # BertModel-style extended additive attention mask (B, 1, 1, S);
    # mask out the last two key positions of the second example.
    attn_mask = jnp.ones((B, S), jnp.float32).at[1, -2:].set(0.0)
    ext_mask = (1.0 - attn_mask)[:, None, None, :] * -10000.0

    params = init_params(k2, H, INTER, num_layers=1)

    all_layers = roberta_self_encoder_fwd(hidden, ext_mask, params, NUM_HEADS,
                                          output_all_encoded_layers=True)
    jax.block_until_ready(all_layers)
    assert len(all_layers) == 1
    assert all_layers[0].shape == (B, S, H)
    assert all_layers[0].dtype == jnp.float32
    assert bool(jnp.all(jnp.isfinite(all_layers[0])))
    print("KERNEL_OK")
</pallas_src>

<mosaic_0001>
module attributes {stable_mosaic.version = 11 : i64} {
  func.func @_linear_kernel(%arg0: i32, %arg1: i32, %arg2: i32, %arg3: memref<16x32xbf16, #tpu.memory_space<vmem>>, %arg4: memref<32x96xbf16, #tpu.memory_space<vmem>>, %arg5: memref<1x96xf32, #tpu.memory_space<vmem>>, %arg6: memref<16x96xbf16, #tpu.memory_space<vmem>>, %arg7: memref<16x96xf32, #tpu.memory_space<vmem>>) attributes {dimension_semantics = [#tpu.dimension_semantics<parallel>, #tpu.dimension_semantics<parallel>, #tpu.dimension_semantics<arbitrary>], iteration_bounds = array<i64: 1, 1, 1>, scalar_prefetch = 0 : i64, scratch_operands = 1 : i64, tpu.core_type = #tpu.core_type<tc>, window_params = [{transform_indices = @transform_0, window_bounds = array<i64: 16, 32>}, {transform_indices = @transform_1, window_bounds = array<i64: 32, 96>}, {transform_indices = @transform_2, window_bounds = array<i64: 1, 96>}, {transform_indices = @transform_3, window_bounds = array<i64: 16, 96>}]} {
    %c0_i32 = arith.constant 0 : i32
    %0 = arith.cmpi eq, %arg2, %c0_i32 : i32
    %1 = arith.extui %0 : i1 to i32
    %c0_i32_0 = arith.constant 0 : i32
    %2 = arith.cmpi ne, %1, %c0_i32_0 : i32
    scf.if %2 {
      %cst_10 = arith.constant 0.000000e+00 : f32
      %12 = vector.broadcast %cst_10 : f32 to vector<16x96xf32>
      %c0_11 = arith.constant 0 : index
      %c0_12 = arith.constant 0 : index
      %13 = vector.load %arg7[%c0_11, %c0_12] : memref<16x96xf32, #tpu.memory_space<vmem>>, vector<16x96xf32>
      tpu.vector_store %arg7[%c0_11, %c0_12], %12 {strides = array<i32>} : memref<16x96xf32, #tpu.memory_space<vmem>>, vector<16x96xf32>,
    } else {
    }
    %c0 = arith.constant 0 : index
    %c0_1 = arith.constant 0 : index
    %3 = vector.load %arg7[%c0, %c0_1] : memref<16x96xf32, #tpu.memory_space<vmem>>, vector<16x96xf32>
    %c0_2 = arith.constant 0 : index
    %c0_3 = arith.constant 0 : index
    %4 = vector.load %arg3[%c0_2, %c0_3] : memref<16x32xbf16, #tpu.memory_space<vmem>>, vector<16x32xbf16>
    %c0_4 = arith.constant 0 : index
    %c0_5 = arith.constant 0 : index
    %5 = vector.load %arg4[%c0_4, %c0_5] : memref<32x96xbf16, #tpu.memory_space<vmem>>, vector<32x96xbf16>
    %cst = arith.constant dense<0.000000e+00> : vector<16x96xf32>
    %6 = tpu.matmul %4, %5, %cst {dimension_numbers = #tpu.dot_dimension_numbers<[1], [0], [0], [1], [0, 0, 1, 1], [], []>} : vector<16x32xbf16>, vector<32x96xbf16>, vector<16x96xf32> -> vector<16x96xf32>
    %7 = arith.addf %3, %6 : vector<16x96xf32>
    %c0_6 = arith.constant 0 : index
    %c0_7 = arith.constant 0 : index
    %8 = vector.load %arg7[%c0_6, %c0_7] : memref<16x96xf32, #tpu.memory_space<vmem>>, vector<16x96xf32>
    tpu.vector_store %arg7[%c0_6, %c0_7], %7 {strides = array<i32>} : memref<16x96xf32, #tpu.memory_space<vmem>>, vector<16x96xf32>,
    %c0_i32_8 = arith.constant 0 : i32
    %9 = arith.cmpi eq, %arg2, %c0_i32_8 : i32
    %10 = arith.extui %9 : i1 to i32
    %c0_i32_9 = arith.constant 0 : i32
    %11 = arith.cmpi ne, %10, %c0_i32_9 : i32
    scf.if %11 {
      %c0_10 = arith.constant 0 : index
      %c0_11 = arith.constant 0 : index
      %12 = vector.load %arg7[%c0_10, %c0_11] : memref<16x96xf32, #tpu.memory_space<vmem>>, vector<16x96xf32>
      %c0_12 = arith.constant 0 : index
      %c0_13 = arith.constant 0 : index
      %13 = vector.load %arg5[%c0_12, %c0_13] : memref<1x96xf32, #tpu.memory_space<vmem>>, vector<1x96xf32>
      %14 = vector.broadcast %13 : vector<1x96xf32> to vector<16x96xf32>
      %15 = arith.addf %12, %14 : vector<16x96xf32>
      %16 = arith.truncf %15 : vector<16x96xf32> to vector<16x96xbf16>
      %c0_14 = arith.constant 0 : index
      %c0_15 = arith.constant 0 : index
      %17 = vector.load %arg6[%c0_14, %c0_15] : memref<16x96xbf16, #tpu.memory_space<vmem>>, vector<16x96xbf16>
      tpu.vector_store %arg6[%c0_14, %c0_15], %16 {strides = array<i32>} : memref<16x96xbf16, #tpu.memory_space<vmem>>, vector<16x96xbf16>,
    } else {
    }
    return
  }
  func.func @transform_0(%arg0: i32, %arg1: i32, %arg2: i32) -> (i32, i32) {
    %c0_i32 = arith.constant 0 : i32
    return %arg0, %arg2 : i32, i32
  }
  func.func @transform_1(%arg0: i32, %arg1: i32, %arg2: i32) -> (i32, i32) {
    %c0_i32 = arith.constant 0 : i32
    return %arg2, %arg1 : i32, i32
  }
  func.func @transform_2(%arg0: i32, %arg1: i32, %arg2: i32) -> (i32, i32) {
    %c0_i32 = arith.constant 0 : i32
    %c0_i32_0 = arith.constant 0 : i32
    return %c0_i32, %arg1 : i32, i32
  }
  func.func @transform_3(%arg0: i32, %arg1: i32, %arg2: i32) -> (i32, i32) {
    %c0_i32 = arith.constant 0 : i32
    return %arg0, %arg1 : i32, i32
  }
}

</mosaic_0001>

<llo_original>
// kernel: tpu_custom_call.1
$region0: #{tpu_custom_call.1}
  #allocation0 [shape = 'u32[]', space=smem, size = 0x4, offset = 0x4, fixed_abs, tag = 'smem constant byte address 0x4 - core index']
  #allocation1 [shape = 'u32[144,128]{1,0:T(1,128)}', space=vmem, size = 0x12000, scoped, tag = 'internal scratch']
  #allocation2 [shape = 'f32[16,96]{1,0:T(8,128)}', space=vmem, size = 0x2000, scoped, tag = 'scratch operand']
  %s0 = inlined_call_operand.hbm [shape: bf16[16,32], index: 0, kind: input, shape index: {}]
  %s1 = inlined_call_operand.hbm [shape: bf16[32,96], index: 1, kind: input, shape index: {}]
  %s2 = inlined_call_operand.vmem [shape: f32[1,96], index: 2, kind: input, shape index: {}]
  %s3 = inlined_call_operand.hbm [shape: bf16[16,96], index: 3, kind: output, shape index: {}]
  %s4 = sld [smem:[#allocation0]]
  $region38: #{tpu_custom_call.1} parent=0
    _
  %s6 = ssub.s32 1, %s4
  %s7 = scalar_select 0, %s6, %s4
  $region1: #{tpu_custom_call.1} parent=0
    #allocation3 [shape = 'u8[4096]{0}', space=vmem, size = 0x1000, scoped, tag = 'input window, operand 0, single buffered']
    #allocation4 [shape = 's32[1]{0}', space=sflag, size = 0x4, scoped, tag = 'scoped memory for tpu_custom_call.1']
    #allocation5 [shape = 's32[1]{0}', space=sflag, size = 0x4, scoped, tag = 'scoped memory for tpu_custom_call.1']
    #allocation6 [shape = 'u8[8192]{0}', space=vmem, size = 0x2000, scoped, tag = 'input window, operand 1, single buffered']
    #allocation7 [shape = 's32[1]{0}', space=sflag, size = 0x4, scoped, tag = 'scoped memory for tpu_custom_call.1']
    #allocation8 [shape = 'u8[4096]{0}', space=vmem, size = 0x1000, scoped, tag = 'output window, operand 0, single buffered']
    %8 = vsyncpa [#allocation4], 0
    %9 = vsyncpa [#allocation7], 0
    %10 = vsyncpa [#allocation5], 0
    // Predicated region
    $region2: #{tpu_custom_call.1} parent=1 // pred_check
      _
    $region3: #{tpu_custom_call.1} parent=1 // pred_check_branch
      %12 = sbr.rel (0) target = $region5
    $region4: #{tpu_custom_call.1} parent=1 // pred_region
      %s14 = ssub.s32 128, 128
      %15 = vsyncadd [#allocation4], %s14
      %s16 = sshll.u32 [#allocation3], 4
      %s17 = int_to_ptr.vmem [resolvable:$true] %s16
      %22 = dma.hbm_to_vmem [thread:$0]  %s0, 128, %s17, [#allocation4], 64, 64, 4
    $region5: #{tpu_custom_call.1} parent=1 // pred_fallthru
      _
    // Predicated region
    $region6: #{tpu_custom_call.1} parent=1 // pred_check
      _
    $region7: #{tpu_custom_call.1} parent=1 // pred_check_branch
      %24 = sbr.rel (0) target = $region9
    $region8: #{tpu_custom_call.1} parent=1 // pred_region
      %s26 = ssub.s32 256, 256
      %27 = vsyncadd [#allocation7], %s26
      %s28 = sshll.u32 [#allocation6], 4
      %s29 = int_to_ptr.vmem [resolvable:$true] %s28
      %34 = dma.hbm_to_vmem [thread:$0]  %s1, 256, %s29, [#allocation7], 64, 64, 4
    $region9: #{tpu_custom_call.1} parent=1 // pred_fallthru
      _
    // Predicated region
    $region10: #{tpu_custom_call.1} parent=1 // pred_check
      _
    $region11: #{tpu_custom_call.1} parent=1 // pred_check_branch
      %36 = sbr.rel (0) target = $region13
    $region12: #{tpu_custom_call.1} parent=1 // pred_region
      _
    $region13: #{tpu_custom_call.1} parent=1 // pred_fallthru
      _
    // Predicated region
    $region14: #{tpu_custom_call.1} parent=1 // pred_check
      _
    $region15: #{tpu_custom_call.1} parent=1 // pred_check_branch
      %38 = sbr.rel (0) target = $region17
    $region16: #{tpu_custom_call.1} parent=1 // pred_region
      %39 = dma.done [#allocation4], 128
    $region17: #{tpu_custom_call.1} parent=1 // pred_fallthru
      _
    // Predicated region
    $region18: #{tpu_custom_call.1} parent=1 // pred_check
      _
    $region19: #{tpu_custom_call.1} parent=1 // pred_check_branch
      %41 = sbr.rel (0) target = $region21
    $region20: #{tpu_custom_call.1} parent=1 // pred_region
      %42 = dma.done [#allocation7], 256
    $region21: #{tpu_custom_call.1} parent=1 // pred_fallthru
      _
    %p44 = scmp.eq.s32.totalorder 0, 0
    // Predicated region
    $region22: #{tpu_custom_call.1} parent=1 // pred_check
      %p45 = pneg %p44
    $region23: #{tpu_custom_call.1} parent=1 // pred_check_branch
      %47 = sbr.rel (%p45) target = $region25
    $region24: #{tpu_custom_call.1} parent=1 // pred_region
      %vm48 = vcmask 785408
      %49 = vst.msk [vmem:[#allocation2] sm:$0xff] %vm48, 0.0
      %50 = vst.msk [vmem:[#allocation2 + $0x8] sm:$0xff] %vm48, 0.0
    $region25: #{tpu_custom_call.1} parent=1 // pred_fallthru
      _
    %v51 = vld [vmem:[#allocation2] sm:$0xff]
    %v52 = vld [vmem:[#allocation2 + $0x8] sm:$0xff]
    %v53 = vld [vmem:[#allocation3] sm:$0xf]
    %v54 = vld [vmem:[#allocation3 + $0x4] sm:$0xf]
    %v55 = vld [vmem:[#allocation6] sm:$0xf]
    %v56 = vld [vmem:[#allocation6 + $0x4] sm:$0xf]
    %v57 = vld [vmem:[#allocation6 + $0x8] sm:$0xf]
    %v58 = vld [vmem:[#allocation6 + $0xc] sm:$0xf]
    %v61 = vunpack.c.l.b16 %v53
    %v62 = vunpack.c.l.b16 %v54
    %v63 = vpack.c.b16 %v62, %v61
    %v68 = vunpack.c.l.b16 %v55
    %v69 = vunpack.c.l.b16 %v56
    %v70 = vunpack.c.l.b16 %v57
    %v71 = vunpack.c.l.b16 %v58
    %v72 = vpack.c.b16 %v69, %v68
    %v73 = vpack.c.b16 %v71, %v70
    %vm76 = vcmask 261120
    %v78 = vsel %vm76, %v63, 0
    %80 = vmatprep.subr.bf16.mxu0 0
    %81 = vmatpush1.bf16.msra.mxu0 %v72
    %82 = vmatprep.subr.bf16.mxu0 0
    %83 = vmatpush1.bf16.msra.mxu0 %v73
    %84 = vmatprep.subr.bf16.mxu0 0
    %85 = vmatpush1.bf16.msra.mxu0 0
    %86 = vmatprep.subr.bf16.mxu0 0
    %87 = vmatpush1.bf16.msra.mxu0 0
    %88 = vmatprep.subr.bf16.mxu0 0
    %89 = vmatpush1.bf16.msra.mxu0 0
    %90 = vmatprep.subr.bf16.mxu0 0
    %91 = vmatpush1.bf16.msra.mxu0 0
    %92 = vmatprep.subr.bf16.mxu0 0
    %93 = vmatpush1.bf16.msra.mxu0 0
    %94 = vmatprep.subr.bf16.mxu0 0
    %95 = vmatpush1.bf16.msra.mxu0 0
    %96 = vmatprep.subr.bf16.mxu0 0
    %97 = vmatpush1.bf16.msra.mxu0 0
    %98 = vmatprep.subr.bf16.mxu0 0
    %99 = vmatpush1.bf16.msra.mxu0 0
    %100 = vmatprep.subr.bf16.mxu0 0
    %101 = vmatpush1.bf16.msra.mxu0 0
    %102 = vmatprep.subr.bf16.mxu0 0
    %103 = vmatpush1.bf16.msra.mxu0 0
    %104 = vmatprep.subr.bf16.mxu0 0
    %105 = vmatpush1.bf16.msra.mxu0 0
    %106 = vmatprep.subr.bf16.mxu0 0
    %107 = vmatpush1.bf16.msra.mxu0 0
    %108 = vmatprep.subr.bf16.mxu0 0
    %109 = vmatpush1.bf16.msra.mxu0 0
    %110 = vmatprep.subr.bf16.mxu0 0
    %111 = vmatpush1.bf16.msra.mxu0 0
    %112 = vmatprep.mubr.bf16.mxu0 0
    %113 = vmatmul.mubr.bf16.gmra.mrb[0].mxu0 %v78
    %v114 = vpop.f32.mrb[0].mxu0
    %v115 = vadd.f32 0.0, %v114
    %v116 = vpop.f32.mrb[0].mxu0
    %v117 = vpop.f32.mrb[0].mxu0
    %v118 = vadd.f32 0.0, %v117
    %v119 = vpop.f32.mrb[0].mxu0
    %120 = vdwg.mxu0
    %v121 = vadd.f32 %v51, %v115
    %v122 = vadd.f32 %v52, %v118
    %vm123 = vcmask 785408
    %124 = vst.msk [vmem:[#allocation2] sm:$0xff] %vm123, %v121
    %125 = vst.msk [vmem:[#allocation2 + $0x8] sm:$0xff] %vm123, %v122
    // Predicated region
    $region26: #{tpu_custom_call.1} parent=1 // pred_check
      %p126 = pneg %p44
    $region27: #{tpu_custom_call.1} parent=1 // pred_check_branch
      %128 = sbr.rel (%p126) target = $region29
    $region28: #{tpu_custom_call.1} parent=1 // pred_region
      %v129 = vld [vmem:[#allocation2] sm:$0xff]
      %v130 = vld [vmem:[#allocation2 + $0x8] sm:$0xff]
      %v131 = vld [vmem:[%s2] sm:$0x1]
      %v133 = vlaneseq
      %v134 = vshrl.u32 %v133, 7
      %v135 = vsub.s32 0, %v134
      %v136 = vrot.slane %v131, %v135
      %v138 = vadd.f32 %v129, %v136
      %v139 = vadd.f32 %v130, %v136
      %v140 = vpack.c.bf16 %v139, %v138
      %v142 = vunpack.c.l.b16 %v140
      %v143 = vunpack.c.h.b16 %v140
      %v144 = vpack.c.b16 %v142, %v142
      %v145 = vpack.c.b16 %v143, %v143
      %vm148 = vcmask 781312
      %149 = vst.msk [vmem:[#allocation8] sm:$0xf] %vm148, %v144
      %150 = vst.msk [vmem:[#allocation8 + $0x4] sm:$0xf] %vm148, %v145
    $region29: #{tpu_custom_call.1} parent=1 // pred_fallthru
      _
    // Predicated region
    $region30: #{tpu_custom_call.1} parent=1 // pred_check
      _
    $region31: #{tpu_custom_call.1} parent=1 // pred_check_branch
      %152 = sbr.rel (0) target = $region33
    $region32: #{tpu_custom_call.1} parent=1 // pred_region
      %s154 = ssub.s32 128, 128
      %155 = vsyncadd [#allocation5], %s154
      %s156 = sshll.u32 [#allocation8], 4
      %s157 = int_to_ptr.vmem [resolvable:$true] %s156
      %162 = dma.vmem_to_hbm [thread:$0]  %s157, 128, %s3, [#allocation5], 64, 64, 4
    $region33: #{tpu_custom_call.1} parent=1 // pred_fallthru
      _
    // Predicated region
    $region34: #{tpu_custom_call.1} parent=1 // pred_check
      _
    $region35: #{tpu_custom_call.1} parent=1 // pred_check_branch
      %164 = sbr.rel (0) target = $region37
    $region36: #{tpu_custom_call.1} parent=1 // pred_region
      %165 = dma.done [#allocation5], 128
    $region37: #{tpu_custom_call.1} parent=1 // pred_fallthru
      _
    %166 = vsyncpa [#allocation4], 1
    %167 = vsyncpa [#allocation7], 1
    %168 = vsyncpa [#allocation5], 1

</llo_original>
